<compile_context>
chip_gen: v6e
topology: v6e:2x2x1
jax: 0.10.0
libtpu: 0.0.40
codegen_flags: <defaults>
</compile_context>

<pallas_src>
import functools

import jax
import jax.numpy as jnp
from jax.experimental import pallas as pl
from jax.experimental.pallas import tpu as pltpu


def _margin_loss_kernel(logits_ref, target_ref, partial_ref, *,
                        n_classes, n_valid, tn):
    """One grid step = `tn` spatial positions (all batches, all classes).

    partial_ref is a (1, tn) row of per-position losses summed over batch;
    padded positions are written as 0.
    """
    l = logits_ref[...].astype(jnp.float32)                   # (B, C, tn)

    # L2-normalize over the class axis (== logits / logits.norm(dim=1)).
    norm = jnp.sqrt(jnp.sum(l * l, axis=1, keepdims=True))    # (B, 1, tn)
    ln = l / norm                                             # (B, C, tn)

    tgt = target_ref[...]                                     # (B, tn) int32
    class_ids = jax.lax.broadcasted_iota(jnp.int32, ln.shape, 1)
    onehot = tgt[:, None, :] == class_ids                     # (B, C, tn) bool

    e = jnp.exp(ln)                                           # (B, C, tn)
    s_all = jnp.sum(e, axis=1)                                # (B, tn)
    e_t = jnp.sum(jnp.where(onehot, e, 0.0), axis=1)          # (B, tn)  exp(l_t)
    l_t = jnp.sum(jnp.where(onehot, ln, 0.0), axis=1)         # (B, tn)  l_t

    # pred = sum_{c != t} exp(l_c) / (C - 1) * exp(-l_t)
    pred = (s_all - e_t) / float(n_classes - 1) * jnp.exp(-l_t)
    elem = jnp.log(1.0 + pred)                                # (B, tn)

    # Mask out padded spatial positions.
    pos = pl.program_id(0) * tn + jax.lax.broadcasted_iota(
        jnp.int32, elem.shape, 1)
    elem = jnp.where(pos < n_valid, elem, 0.0)

    partial_ref[...] = jnp.sum(elem, axis=0, keepdims=True)   # (1, tn)


def margin_loss(logits, target):
    """Pallas-backed equivalent of MarginLoss.forward."""
    B, C = int(logits.shape[0]), int(logits.shape[1])
    N = 1
    for d in logits.shape[2:]:
        N *= int(d)

    logits3 = logits.reshape(B, C, N)                 # native dtype; f32-cast in kernel
    target2 = target.reshape(B, N).astype(jnp.int32)

    LANE = 128
    n_pad = ((N + LANE - 1) // LANE) * LANE

    # Spatial tile size: as large as a modest VMEM budget allows (multiple of
    # 128), so small problems become a single grid step; large ones pipeline.
    itemsize = jnp.dtype(logits.dtype).itemsize
    budget = 8 * 1024 * 1024                           # per double-buffered input
    tn_cap = max(LANE, (budget // (2 * B * C * itemsize)) // LANE * LANE)
    tn = min(n_pad, tn_cap)
    n_pad = ((n_pad + tn - 1) // tn) * tn
    grid = (n_pad // tn,)

    if n_pad != N:
        logits3 = jnp.pad(logits3, ((0, 0), (0, 0), (0, n_pad - N)),
                          constant_values=1)           # nonzero norm in the padding
        target2 = jnp.pad(target2, ((0, 0), (0, n_pad - N)))

    kernel = functools.partial(_margin_loss_kernel,
                               n_classes=C, n_valid=N, tn=tn)

    tile_bytes = B * C * tn * itemsize + B * tn * 4 + tn * 4
    vmem_limit = int(min(64 * 1024 * 1024,
                         max(4 * tile_bytes + (4 << 20), 16 << 20)))

    partials = pl.pallas_call(
        kernel,
        out_shape=jax.ShapeDtypeStruct((1, n_pad), jnp.float32),
        grid_spec=pltpu.PrefetchScalarGridSpec(
            num_scalar_prefetch=0,
            grid=grid,
            in_specs=[
                pl.BlockSpec((B, C, tn), lambda n: (0, 0, n)),   # logits tile
                pl.BlockSpec((B, tn), lambda n: (0, n)),         # target tile
            ],
            out_specs=pl.BlockSpec((1, tn), lambda n: (0, n)),   # per-position losses
        ),
        compiler_params=pltpu.CompilerParams(
            dimension_semantics=("parallel",),
            vmem_limit_bytes=vmem_limit),
    )(logits3, target2)

    return jnp.sum(partials) / float(B * N)


def _reference_margin_loss(logits, target):
    """Pure-JAX transcription of the PyTorch module (for verification)."""
    B, C = logits.shape[0], logits.shape[1]
    lg = logits.astype(jnp.float32)
    lg = lg / jnp.sqrt(jnp.sum(lg * lg, axis=1, keepdims=True))
    lg = lg.reshape(B, C, -1)
    tgt = target.reshape(B, -1)
    onehot = jax.nn.one_hot(tgt, C, axis=1, dtype=jnp.float32)        # (B, C, N)
    pred = (jnp.exp(lg * (1.0 - onehot)) - onehot).mean(axis=1) * C / (C - 1)
    pred = pred * jnp.sum(jnp.exp(-lg) * onehot, axis=1)
    return jnp.mean(jnp.log(1.0 + pred))


if __name__ == "__main__":
    key = jax.random.PRNGKey(0)
    k1, k2 = jax.random.split(key)

    B, C, H, W = 2, 4, 16, 16
    logits = jax.random.normal(k1, (B, C, H, W), dtype=jnp.float32)
    target = jax.random.randint(k2, (B, H, W), 0, C, dtype=jnp.int32)

    loss = margin_loss(logits, target)
    jax.block_until_ready(loss)

    ref = _reference_margin_loss(logits, target)
    assert jnp.allclose(loss, ref, atol=1e-5, rtol=1e-5), (loss, ref)

    print("KERNEL_OK")
</pallas_src>

<mosaic_0001>
module attributes {stable_mosaic.version = 11 : i64} {
  func.func @_margin_loss_kernel(%arg0: i32, %arg1: memref<2x4x256xf32, #tpu.memory_space<vmem>>, %arg2: memref<2x256xi32, #tpu.memory_space<vmem>>, %arg3: memref<1x256xf32, #tpu.memory_space<vmem>>) attributes {dimension_semantics = [#tpu.dimension_semantics<parallel>], iteration_bounds = array<i64: 1>, scalar_prefetch = 0 : i64, scratch_operands = 0 : i64, tpu.core_type = #tpu.core_type<tc>, window_params = [{transform_indices = @transform_0, window_bounds = array<i64: 2, 4, 256>}, {transform_indices = @transform_1, window_bounds = array<i64: 2, 256>}, {transform_indices = @transform_2, window_bounds = array<i64: 1, 256>}]} {
    %c0 = arith.constant 0 : index
    %c0_0 = arith.constant 0 : index
    %c0_1 = arith.constant 0 : index
    %0 = vector.load %arg1[%c0, %c0_0, %c0_1] : memref<2x4x256xf32, #tpu.memory_space<vmem>>, vector<2x4x256xf32>
    %1 = arith.mulf %0, %0 : vector<2x4x256xf32>
    %cst = arith.constant dense<0.000000e+00> : vector<2x256xf32>
    %2 = vector.multi_reduction <add>, %1, %cst [1] : vector<2x4x256xf32> to vector<2x256xf32>
    %3 = vector.shape_cast %2 : vector<2x256xf32> to vector<2x1x256xf32>
    %4 = math.sqrt %3 : vector<2x1x256xf32>
    %5 = vector.broadcast %4 : vector<2x1x256xf32> to vector<2x4x256xf32>
    %6 = arith.divf %0, %5 : vector<2x4x256xf32>
    %c0_2 = arith.constant 0 : index
    %c0_3 = arith.constant 0 : index
    %7 = vector.load %arg2[%c0_2, %c0_3] : memref<2x256xi32, #tpu.memory_space<vmem>>, vector<2x256xi32>
    %8 = tpu.iota {dimensions = array<i32: 1>} : vector<2x4x256xi32>
    %9 = vector.shape_cast %7 : vector<2x256xi32> to vector<2x1x256xi32>
    %10 = vector.broadcast %9 : vector<2x1x256xi32> to vector<2x4x256xi32>
    %11 = arith.cmpi eq, %10, %8 : vector<2x4x256xi32>
    %12 = math.exp %6 : vector<2x4x256xf32>
    %cst_4 = arith.constant dense<0.000000e+00> : vector<2x256xf32>
    %13 = vector.multi_reduction <add>, %12, %cst_4 [1] : vector<2x4x256xf32> to vector<2x256xf32>
    %cst_5 = arith.constant 0.000000e+00 : f32
    %14 = vector.broadcast %cst_5 : f32 to vector<2x4x256xf32>
    %15 = arith.select %11, %12, %14 : vector<2x4x256xi1>, vector<2x4x256xf32>
    %cst_6 = arith.constant dense<0.000000e+00> : vector<2x256xf32>
    %16 = vector.multi_reduction <add>, %15, %cst_6 [1] : vector<2x4x256xf32> to vector<2x256xf32>
    %cst_7 = arith.constant 0.000000e+00 : f32
    %17 = vector.broadcast %cst_7 : f32 to vector<2x4x256xf32>
    %18 = arith.select %11, %6, %17 : vector<2x4x256xi1>, vector<2x4x256xf32>
    %cst_8 = arith.constant dense<0.000000e+00> : vector<2x256xf32>
    %19 = vector.multi_reduction <add>, %18, %cst_8 [1] : vector<2x4x256xf32> to vector<2x256xf32>
    %20 = arith.subf %13, %16 : vector<2x256xf32>
    %cst_9 = arith.constant 3.000000e+00 : f32
    %21 = vector.broadcast %cst_9 : f32 to vector<2x256xf32>
    %22 = arith.divf %20, %21 : vector<2x256xf32>
    %cst_10 = arith.constant 0.000000e+00 : f32
    %23 = vector.broadcast %cst_10 : f32 to vector<2x256xf32>
    %24 = arith.subf %23, %19 : vector<2x256xf32>
    %25 = math.exp %24 : vector<2x256xf32>
    %26 = arith.mulf %22, %25 : vector<2x256xf32>
    %cst_11 = arith.constant 1.000000e+00 : f32
    %27 = vector.broadcast %cst_11 : f32 to vector<2x256xf32>
    %28 = arith.addf %27, %26 : vector<2x256xf32>
    %29 = math.log %28 : vector<2x256xf32>
    %c256_i32 = arith.constant 256 : i32
    %30 = arith.muli %arg0, %c256_i32 : i32
    %31 = tpu.iota {dimensions = array<i32: 1>} : vector<2x256xi32>
    %32 = vector.broadcast %30 : i32 to vector<2x256xi32>
    %33 = arith.addi %32, %31 : vector<2x256xi32>
    %c256_i32_12 = arith.constant 256 : i32
    %34 = vector.broadcast %c256_i32_12 : i32 to vector<2x256xi32>
    %35 = arith.cmpi slt, %33, %34 : vector<2x256xi32>
    %cst_13 = arith.constant 0.000000e+00 : f32
    %36 = vector.broadcast %cst_13 : f32 to vector<2x256xf32>
    %37 = arith.select %35, %29, %36 : vector<2x256xi1>, vector<2x256xf32>
    %cst_14 = arith.constant dense<0.000000e+00> : vector<256xf32>
    %38 = vector.multi_reduction <add>, %37, %cst_14 [0] : vector<2x256xf32> to vector<256xf32>
    %39 = vector.shape_cast %38 : vector<256xf32> to vector<1x256xf32>
    %c0_15 = arith.constant 0 : index
    %c0_16 = arith.constant 0 : index
    %40 = vector.load %arg3[%c0_15, %c0_16] : memref<1x256xf32, #tpu.memory_space<vmem>>, vector<1x256xf32>
    tpu.vector_store %arg3[%c0_15, %c0_16], %39 {strides = array<i32>} : memref<1x256xf32, #tpu.memory_space<vmem>>, vector<1x256xf32>,
    return
  }
  func.func @transform_0(%arg0: i32) -> (i32, i32, i32) {
    %c0_i32 = arith.constant 0 : i32
    %c0_i32_0 = arith.constant 0 : i32
    %c0_i32_1 = arith.constant 0 : i32
    return %c0_i32, %c0_i32_0, %arg0 : i32, i32, i32
  }
  func.func @transform_1(%arg0: i32) -> (i32, i32) {
    %c0_i32 = arith.constant 0 : i32
    %c0_i32_0 = arith.constant 0 : i32
    return %c0_i32, %arg0 : i32, i32
  }
  func.func @transform_2(%arg0: i32) -> (i32, i32) {
    %c0_i32 = arith.constant 0 : i32
    %c0_i32_0 = arith.constant 0 : i32
    return %c0_i32, %arg0 : i32, i32
  }
}

</mosaic_0001>

<llo_original>
// kernel: tpu_custom_call.1
$region0: #{tpu_custom_call.1}
  #allocation0 [shape = 'u32[]', space=smem, size = 0x4, offset = 0x4, fixed_abs, tag = 'smem constant byte address 0x4 - core index']
  #allocation1 [shape = 'u32[144,128]{1,0:T(1,128)}', space=vmem, size = 0x12000, scoped, tag = 'internal scratch']
  %s0 = inlined_call_operand.hbm [shape: f32[2,4,256], index: 0, kind: input, shape index: {}]
  %s1 = inlined_call_operand.hbm [shape: s32[2,256], index: 1, kind: input, shape index: {}]
  %s2 = inlined_call_operand.hbm [shape: f32[1,256], index: 2, kind: output, shape index: {}]
  %s3 = sld [smem:[#allocation0]]
  $region26: #{tpu_custom_call.1} parent=0
    _
  %s5 = ssub.s32 1, %s3
  %s6 = scalar_select 0, %s5, %s3
  $region1: #{tpu_custom_call.1} parent=0
    #allocation2 [shape = 'u8[8192]{0}', space=vmem, size = 0x2000, scoped, tag = 'input window, operand 0, single buffered']
    #allocation3 [shape = 's32[1]{0}', space=sflag, size = 0x4, scoped, tag = 'scoped memory for tpu_custom_call.1']
    #allocation4 [shape = 's32[1]{0}', space=sflag, size = 0x4, scoped, tag = 'scoped memory for tpu_custom_call.1']
    #allocation5 [shape = 'u8[2048]{0}', space=vmem, size = 0x800, scoped, tag = 'input window, operand 1, single buffered']
    #allocation6 [shape = 's32[1]{0}', space=sflag, size = 0x4, scoped, tag = 'scoped memory for tpu_custom_call.1']
    #allocation7 [shape = 'u8[1024]{0}', space=vmem, size = 0x400, scoped, tag = 'output window, operand 0, single buffered']
    %7 = vsyncpa [#allocation3], 0
    %8 = vsyncpa [#allocation6], 0
    %9 = vsyncpa [#allocation4], 0
    // Predicated region
    $region2: #{tpu_custom_call.1} parent=1 // pred_check
      _
    $region3: #{tpu_custom_call.1} parent=1 // pred_check_branch
      %11 = sbr.rel (0) target = $region5
    $region4: #{tpu_custom_call.1} parent=1 // pred_region
      %s13 = ssub.s32 256, 256
      %14 = vsyncadd [#allocation3], %s13
      %s15 = sshll.u32 [#allocation2], 4
      %s16 = int_to_ptr.vmem [resolvable:$true] %s15
      %21 = dma.hbm_to_vmem [thread:$0]  %s0, 256, %s16, [#allocation3], 128, 128, 8
    $region5: #{tpu_custom_call.1} parent=1 // pred_fallthru
      _
    // Predicated region
    $region6: #{tpu_custom_call.1} parent=1 // pred_check
      _
    $region7: #{tpu_custom_call.1} parent=1 // pred_check_branch
      %23 = sbr.rel (0) target = $region9
    $region8: #{tpu_custom_call.1} parent=1 // pred_region
      %s25 = ssub.s32 64, 64
      %26 = vsyncadd [#allocation6], %s25
      %s28 = sshll.u32 [#allocation5], 4
      %s29 = int_to_ptr.vmem [resolvable:$true] %s28
      %31 = dma.hbm_to_vmem [thread:$0]  %s1, 64, %s29, [#allocation6]
    $region9: #{tpu_custom_call.1} parent=1 // pred_fallthru
      _
    // Predicated region
    $region10: #{tpu_custom_call.1} parent=1 // pred_check
      _
    $region11: #{tpu_custom_call.1} parent=1 // pred_check_branch
      %33 = sbr.rel (0) target = $region13
    $region12: #{tpu_custom_call.1} parent=1 // pred_region
      %34 = dma.done [#allocation3], 256
    $region13: #{tpu_custom_call.1} parent=1 // pred_fallthru
      _
    // Predicated region
    $region14: #{tpu_custom_call.1} parent=1 // pred_check
      _
    $region15: #{tpu_custom_call.1} parent=1 // pred_check_branch
      %36 = sbr.rel (0) target = $region17
    $region16: #{tpu_custom_call.1} parent=1 // pred_region
      %37 = dma.done [#allocation6], 64
    $region17: #{tpu_custom_call.1} parent=1 // pred_fallthru
      _
    %v38 = vld [vmem:[#allocation2] sm:$0xff]
    %v39 = vld [vmem:[#allocation2 + $0x8] sm:$0xff]
    %v40 = vmul.f32 %v38, %v38
    %v41 = vmul.f32 %v39, %v39
    %v44 = vcombine.high %v40, %v40
    %v45 = vcombine.high %v41, %v41
    %vm48 = vcmask 1043456
    %v49 = vsel %vm48, %v40, 0.0
    %v50 = vrot.slane %v49, 4
    %v51 = vadd.f32 %v49, %v50
    %v52 = vrot.slane %v51, 2
    %v53 = vadd.f32 %v51, %v52
    %v54 = vrot.slane %v53, 1
    %v55 = vadd.f32 %v53, %v54
    %v56 = vsel %vm48, %v44, 0.0
    %v57 = vrot.slane %v56, 4
    %v58 = vadd.f32 %v56, %v57
    %v59 = vrot.slane %v58, 2
    %v60 = vadd.f32 %v58, %v59
    %v61 = vrot.slane %v60, 1
    %v62 = vadd.f32 %v60, %v61
    %v63 = vsel %vm48, %v41, 0.0
    %v64 = vrot.slane %v63, 4
    %v65 = vadd.f32 %v63, %v64
    %v66 = vrot.slane %v65, 2
    %v67 = vadd.f32 %v65, %v66
    %v68 = vrot.slane %v67, 1
    %v69 = vadd.f32 %v67, %v68
    %v70 = vsel %vm48, %v45, 0.0
    %v71 = vrot.slane %v70, 4
    %v72 = vadd.f32 %v70, %v71
    %v73 = vrot.slane %v72, 2
    %v74 = vadd.f32 %v72, %v73
    %v75 = vrot.slane %v74, 1
    %v76 = vadd.f32 %v74, %v75
    %v77 = vrsqrt.pop %v55
    %v78 = vmul.f32 %v55, %v77
    %vm79 = vcmp.eq.f32.partialorder %v55, inf
    %v80 = vsel %vm79, %v55, %v78
    %vm81 = vcmp.eq.f32.partialorder %v55, 0.0
    %v82 = vand.u32 %v55, 2147483648
    %v83 = vsel %vm81, %v82, %v80
    %v84 = vrsqrt.pop %v62
    %v85 = vmul.f32 %v62, %v84
    %vm86 = vcmp.eq.f32.partialorder %v62, inf
    %v87 = vsel %vm86, %v62, %v85
    %vm88 = vcmp.eq.f32.partialorder %v62, 0.0
    %v89 = vand.u32 %v62, 2147483648
    %v90 = vsel %vm88, %v89, %v87
    %v91 = vrsqrt.pop %v69
    %v92 = vmul.f32 %v69, %v91
    %vm93 = vcmp.eq.f32.partialorder %v69, inf
    %v94 = vsel %vm93, %v69, %v92
    %vm95 = vcmp.eq.f32.partialorder %v69, 0.0
    %v96 = vand.u32 %v69, 2147483648
    %v97 = vsel %vm95, %v96, %v94
    %v98 = vrsqrt.pop %v76
    %v99 = vmul.f32 %v76, %v98
    %vm100 = vcmp.eq.f32.partialorder %v76, inf
    %v101 = vsel %vm100, %v76, %v99
    %vm102 = vcmp.eq.f32.partialorder %v76, 0.0
    %v103 = vand.u32 %v76, 2147483648
    %v104 = vsel %vm102, %v103, %v101
    %v109 = vcombine.low %v83, %v90
    %v110 = vcombine.low %v97, %v104
    %v113 = vrcp.pop %v109
    %v114 = vmul.f32 %v38, %v113
    %v115 = vrcp.pop %v110
    %v116 = vmul.f32 %v39, %v115
    %v117 = vld [vmem:[#allocation5] sm:$0xf]
    %v118 = vlaneseq
    %v119 = vshrl.u32 %v118, 7
    %v121 = vunpack.c.l.s4 1966171168
    %v122 = vunpack.c.0.s8 %v121
    %v123 = vlaneseq
    %v124 = vshrl.u32 %v123, 7
    %v125 = vsub.s32 %v122, %v124
    %v126 = vrot.slane %v117, %v125
    %v127 = vcombine.high %v126, %v126
    %v128 = vlaneseq
    %v129 = vshrl.u32 %v128, 7
    %v130 = vsub.s32 0, %v129
    %v131 = vrot.slane %v126, %v130
    %v132 = vlaneseq
    %v133 = vshrl.u32 %v132, 7
    %v134 = vsub.s32 1, %v133
    %v135 = vrot.slane %v126, %v134
    %v136 = vlaneseq
    %v137 = vshrl.u32 %v136, 7
    %v138 = vsub.s32 0, %v137
    %v139 = vrot.slane %v127, %v138
    %v140 = vlaneseq
    %v141 = vshrl.u32 %v140, 7
    %v142 = vsub.s32 1, %v141
    %v143 = vrot.slane %v127, %v142
    %vm144 = vcmp.eq.s32.totalorder %v131, %v119
    %vm145 = vcmp.eq.s32.totalorder %v135, %v119
    %vm146 = vcmp.eq.s32.totalorder %v139, %v119
    %vm147 = vcmp.eq.s32.totalorder %v143, %v119
    %v148 = vmul.f32 %v114, 1.442695
    %v149 = vpow.pop %v148
    %v150 = vmul.f32 %v116, 1.442695
    %v151 = vpow.pop %v150
    %v154 = vcombine.high %v149, %v149
    %v155 = vcombine.high %v151, %v151
    %v158 = vsel %vm48, %v149, 0.0
    %v159 = vrot.slane %v158, 4
    %v160 = vadd.f32 %v158, %v159
    %v161 = vrot.slane %v160, 2
    %v162 = vadd.f32 %v160, %v161
    %v163 = vrot.slane %v162, 1
    %v164 = vadd.f32 %v162, %v163
    %v165 = vsel %vm48, %v154, 0.0
    %v166 = vrot.slane %v165, 4
    %v167 = vadd.f32 %v165, %v166
    %v168 = vrot.slane %v167, 2
    %v169 = vadd.f32 %v167, %v168
    %v170 = vrot.slane %v169, 1
    %v171 = vadd.f32 %v169, %v170
    %v172 = vsel %vm48, %v151, 0.0
    %v173 = vrot.slane %v172, 4
    %v174 = vadd.f32 %v172, %v173
    %v175 = vrot.slane %v174, 2
    %v176 = vadd.f32 %v174, %v175
    %v177 = vrot.slane %v176, 1
    %v178 = vadd.f32 %v176, %v177
    %v179 = vsel %vm48, %v155, 0.0
    %v180 = vrot.slane %v179, 4
    %v181 = vadd.f32 %v179, %v180
    %v182 = vrot.slane %v181, 2
    %v183 = vadd.f32 %v181, %v182
    %v184 = vrot.slane %v183, 1
    %v185 = vadd.f32 %v183, %v184
    %v186 = vsel %vm144, %v149, 0.0
    %v187 = vsel %vm145, %v154, 0.0
    %v188 = vsel %vm146, %v151, 0.0
    %v189 = vsel %vm147, %v155, 0.0
    %v190 = vsel %vm48, %v186, 0.0
    %v191 = vrot.slane %v190, 4
    %v192 = vadd.f32 %v190, %v191
    %v193 = vrot.slane %v192, 2
    %v194 = vadd.f32 %v192, %v193
    %v195 = vrot.slane %v194, 1
    %v196 = vadd.f32 %v194, %v195
    %v197 = vsel %vm48, %v187, 0.0
    %v198 = vrot.slane %v197, 4
    %v199 = vadd.f32 %v197, %v198
    %v200 = vrot.slane %v199, 2
    %v201 = vadd.f32 %v199, %v200
    %v202 = vrot.slane %v201, 1
    %v203 = vadd.f32 %v201, %v202
    %v204 = vsel %vm48, %v188, 0.0
    %v205 = vrot.slane %v204, 4
    %v206 = vadd.f32 %v204, %v205
    %v207 = vrot.slane %v206, 2
    %v208 = vadd.f32 %v206, %v207
    %v209 = vrot.slane %v208, 1
    %v210 = vadd.f32 %v208, %v209
    %v211 = vsel %vm48, %v189, 0.0
    %v212 = vrot.slane %v211, 4
    %v213 = vadd.f32 %v211, %v212
    %v214 = vrot.slane %v213, 2
    %v215 = vadd.f32 %v213, %v214
    %v216 = vrot.slane %v215, 1
    %v217 = vadd.f32 %v215, %v216
    %v220 = vcombine.high %v114, %v114
    %v221 = vcombine.high %v116, %v116
    %v224 = vsel %vm144, %v114, 0.0
    %v225 = vsel %vm145, %v220, 0.0
    %v226 = vsel %vm146, %v116, 0.0
    %v227 = vsel %vm147, %v221, 0.0
    %v228 = vsel %vm48, %v224, 0.0
    %v229 = vrot.slane %v228, 4
    %v230 = vadd.f32 %v228, %v229
    %v231 = vrot.slane %v230, 2
    %v232 = vadd.f32 %v230, %v231
    %v233 = vrot.slane %v232, 1
    %v234 = vadd.f32 %v232, %v233
    %v235 = vsel %vm48, %v225, 0.0
    %v236 = vrot.slane %v235, 4
    %v237 = vadd.f32 %v235, %v236
    %v238 = vrot.slane %v237, 2
    %v239 = vadd.f32 %v237, %v238
    %v240 = vrot.slane %v239, 1
    %v241 = vadd.f32 %v239, %v240
    %v242 = vsel %vm48, %v226, 0.0
    %v243 = vrot.slane %v242, 4
    %v244 = vadd.f32 %v242, %v243
    %v245 = vrot.slane %v244, 2
    %v246 = vadd.f32 %v244, %v245
    %v247 = vrot.slane %v246, 1
    %v248 = vadd.f32 %v246, %v247
    %v249 = vsel %vm48, %v227, 0.0
    %v250 = vrot.slane %v249, 4
    %v251 = vadd.f32 %v249, %v250
    %v252 = vrot.slane %v251, 2
    %v253 = vadd.f32 %v251, %v252
    %v254 = vrot.slane %v253, 1
    %v255 = vadd.f32 %v253, %v254
    %v256 = vsub.f32 %v164, %v196
    %v257 = vsub.f32 %v171, %v203
    %v258 = vsub.f32 %v178, %v210
    %v259 = vsub.f32 %v185, %v217
    %v260 = vrcp.pop 3.0
    %v261 = vmul.f32 %v256, %v260
    %v262 = vmul.f32 %v257, %v260
    %v263 = vmul.f32 %v258, %v260
    %v264 = vmul.f32 %v259, %v260
    %v265 = vsub.f32 0.0, %v234
    %v266 = vsub.f32 0.0, %v241
    %v267 = vsub.f32 0.0, %v248
    %v268 = vsub.f32 0.0, %v255
    %v269 = vmul.f32 %v265, 1.442695
    %v270 = vpow.pop %v269
    %v271 = vmul.f32 %v266, 1.442695
    %v272 = vpow.pop %v271
    %v273 = vmul.f32 %v267, 1.442695
    %v274 = vpow.pop %v273
    %v275 = vmul.f32 %v268, 1.442695
    %v276 = vpow.pop %v275
    %v277 = vmul.f32 %v261, %v270
    %v278 = vmul.f32 %v262, %v272
    %v279 = vmul.f32 %v263, %v274
    %v280 = vmul.f32 %v264, %v276
    %v281 = vadd.f32 %v277, 1.0
    %v282 = vadd.f32 %v278, 1.0
    %v283 = vadd.f32 %v279, 1.0
    %v284 = vadd.f32 %v280, 1.0
    %v285 = vlog2.pop %v281
    %v286 = vmul.f32 %v285, 0.6931472
    %v287 = vlog2.pop %v282
    %v288 = vmul.f32 %v287, 0.6931472
    %v289 = vlog2.pop %v283
    %v290 = vmul.f32 %v289, 0.6931472
    %v291 = vlog2.pop %v284
    %v292 = vmul.f32 %v291, 0.6931472
    %s293 = smul.u32 0, 256
    %v294 = vlaneseq
    %v295 = vand.u32 %v294, 127
    %v296 = vadd.s32 %v295, 128
    %v297 = vstv %s293
    %v298 = vadd.s32 %v297, %v295
    %v299 = vadd.s32 %v297, %v296
    %vm300 = vcmp.lt.s32.totalorder %v298, 256
    %vm301 = vcmp.lt.s32.totalorder %v299, 256
    %vm306 = vcmask 1041409
    %v307 = vsel %vm306, %v290, %v286
    %v308 = vsel %vm306, %v292, %v288
    %v311 = vsel %vm300, %v307, 0.0
    %v312 = vsel %vm301, %v308, 0.0
    %vm313 = vcmask 1041408
    %v314 = vsel %vm313, %v311, 0.0
    %v315 = vrot.slane %v314, 4
    %v316 = vadd.f32 %v314, %v315
    %v317 = vrot.slane %v316, 2
    %v318 = vadd.f32 %v316, %v317
    %v319 = vrot.slane %v318, 1
    %v320 = vadd.f32 %v318, %v319
    %v321 = vsel %vm313, %v312, 0.0
    %v322 = vrot.slane %v321, 4
    %v323 = vadd.f32 %v321, %v322
    %v324 = vrot.slane %v323, 2
    %v325 = vadd.f32 %v323, %v324
    %v326 = vrot.slane %v325, 1
    %v327 = vadd.f32 %v325, %v326
    %v330 = vcombine.low %v320, %v327
    %v332 = vunpack.c.l.s4 1966171168
    %v333 = vunpack.c.0.s8 %v332
    %v334 = vlaneseq
    %v335 = vshrl.u32 %v334, 7
    %v336 = vsub.s32 %v333, %v335
    %v337 = vrot.slane %v330, %v336
    %v339 = vunpack.c.l.s4 1966171168
    %v340 = vunpack.c.0.s8 %v339
    %v341 = vlaneseq
    %v342 = vshrl.u32 %v341, 7
    %v343 = vsub.s32 %v340, %v342
    %v344 = vrot.slane %v337, %v343
    %v346 = vlaneseq
    %vm347 = vcmp.ge.s32.totalorder %v346, 0
    %vm348 = vcmp.lt.s32.totalorder %v346, 256
    %vm349 = vmand %vm347, %vm348
    %350 = vst.msk [vmem:[#allocation7] sm:$0x3] %vm349, %v344
    // Predicated region
    $region18: #{tpu_custom_call.1} parent=1 // pred_check
      _
    $region19: #{tpu_custom_call.1} parent=1 // pred_check_branch
      %352 = sbr.rel (0) target = $region21
    $region20: #{tpu_custom_call.1} parent=1 // pred_region
      %s354 = ssub.s32 32, 32
      %355 = vsyncadd [#allocation4], %s354
      %s357 = sshll.u32 [#allocation7], 4
      %s358 = int_to_ptr.vmem [resolvable:$true] %s357
      %360 = dma.vmem_to_hbm [thread:$0]  %s358, 32, %s2, [#allocation4]
    $region21: #{tpu_custom_call.1} parent=1 // pred_fallthru
      _
    // Predicated region
    $region22: #{tpu_custom_call.1} parent=1 // pred_check
      _
    $region23: #{tpu_custom_call.1} parent=1 // pred_check_branch
      %362 = sbr.rel (0) target = $region25
    $region24: #{tpu_custom_call.1} parent=1 // pred_region
      %363 = dma.done [#allocation4], 32
    $region25: #{tpu_custom_call.1} parent=1 // pred_fallthru
      _
    %364 = vsyncpa [#allocation3], 1
    %365 = vsyncpa [#allocation6], 1
    %366 = vsyncpa [#allocation4], 1

</llo_original>
